<compile_context>
chip_gen: v5e
topology: v5e:2x2
jax: 0.10.0
libtpu: 0.0.40
codegen_flags: <defaults>
</compile_context>

<pallas_src>
import math

import jax
import jax.numpy as jnp
from jax.experimental import pallas as pl
from jax.experimental.pallas import tpu as pltpu

_TILE_VMEM_BUDGET = 24 * 1024 * 1024   # target double-buffered tile footprint
_VMEM_LIMIT_BYTES = 48 * 1024 * 1024   # scoped VMEM limit (< v7x 64 MiB physical)


def _matmul_kernel(x_ref, w_ref, o_ref):
    # x_ref: (tile_rows, Kp)   packed batch tile
    # w_ref: (Kp, Np)          grid-invariant block-diagonal W^T
    # o_ref: (tile_rows, Np)   lane-dense packed output tile
    o_ref[...] = jnp.dot(
        x_ref[...], w_ref[...], preferred_element_type=jnp.float32
    ).astype(o_ref.dtype)


def _round_up(x, m):
    return ((x + m - 1) // m) * m


def _pack_factor(K, N):
    """Rows packed per kernel row so the packed output width P*N is a multiple of 128."""
    P = 128 // math.gcd(N, 128)
    # Guard against pathological weight replication (large N not dividing 128, or
    # large K): keep the packed block-diagonal weight under ~2 MiB, else don't pack.
    if P > 1 and (P * K) * (P * N) * 4 > (2 << 20):
        return 1
    return P


def _choose_tile_rows(bp, kp, np_out, vmem_budget_bytes=_TILE_VMEM_BUDGET):
    """Pick the packed-row tile size.

    Targets: large tiles (amortize ~0.35us per grid step), >=4 grid blocks when the
    batch is big enough (>=2 per v7x TensorCore), and a double-buffered footprint
    (x tile + out tile, 2 buffers each) inside the VMEM budget.
    """
    per_row = 2 * 4 * (kp + np_out)                       # f32, double-buffered
    max_rows = max(8, (vmem_budget_bytes // per_row) // 8 * 8)
    for cand in (16384, 8192, 4096, 2048, 1024, 512, 256, 128):
        if cand <= max_rows and bp >= 4 * cand:
            return cand
    # Small batch: one block covering everything (sublane-aligned, VMEM-capped).
    return min(_round_up(max(bp, 1), 8), max_rows)


def linear_coxph_regression(x, weight, *, tile_rows=None):
    """Forward pass of linearCoxPH_Regression: out = x @ weight.T (no bias).

    x:      (B, inputSize)           float32
    weight: (outputSize, inputSize)  float32 (PyTorch nn.Linear weight layout)
    returns (B, outputSize)
    """
    B, K = x.shape
    N, K2 = weight.shape
    assert K == K2, "inputSize mismatch"

    P = _pack_factor(K, N)
    Kp, Np = P * K, P * N
    Bp = -(-B // P)                                       # packed rows (cdiv)

    if tile_rows is None:
        tile_rows = _choose_tile_rows(Bp, Kp, Np)
    tile_rows = max(8, _round_up(int(tile_rows), 8))

    # Pad the batch so it splits into whole tiles (zeros contribute zero rows that
    # are sliced away below) — keeps ragged batches on the tiled, pipelined path.
    bp_pad = _round_up(max(Bp, tile_rows), tile_rows)
    b_pad = bp_pad * P
    if b_pad != B:
        x = jnp.pad(x, ((0, b_pad - B), (0, 0)))
    x_packed = x.reshape(bp_pad, Kp)                      # free view: rows contiguous

    # Block-diagonal W^T, built once in the wrapper (128 KiB for K=32, N=16, P=8).
    wt = weight.T.astype(x.dtype)                         # (K, N)
    if P > 1:
        w_packed = jnp.einsum(
            "pq,kn->pkqn", jnp.eye(P, dtype=wt.dtype), wt
        ).reshape(Kp, Np)
    else:
        w_packed = wt

    grid = (bp_pad // tile_rows,)

    # Advisory hint for XLA's scheduler (HBM-bound op).
    cost = pl.CostEstimate(
        flops=2 * b_pad * K * N,
        transcendentals=0,
        bytes_accessed=4 * (b_pad * K + Kp * Np + b_pad * N),
    )

    out_packed = pl.pallas_call(
        _matmul_kernel,
        out_shape=jax.ShapeDtypeStruct((bp_pad, Np), x.dtype),
        grid_spec=pltpu.PrefetchScalarGridSpec(
            num_scalar_prefetch=0,
            grid=grid,
            in_specs=[
                # Streaming packed batch tile (last dim == full array dim Kp).
                pl.BlockSpec((tile_rows, Kp), lambda i: (i, 0)),
                # Grid-invariant packed weight (full-array block).
                pl.BlockSpec((Kp, Np), lambda i: (0, 0)),
            ],
            # Lane-dense output: Np is a multiple of 128 whenever packing applies.
            out_specs=pl.BlockSpec((tile_rows, Np), lambda i: (i, 0)),
        ),
        compiler_params=pltpu.CompilerParams(
            # Batch axis is embarrassingly parallel -> megacore-shardable on v7x.
            dimension_semantics=("parallel",),
            vmem_limit_bytes=_VMEM_LIMIT_BYTES,
        ),
        cost_estimate=cost,
    )(x_packed, w_packed)

    out = out_packed.reshape(b_pad, N)                    # free view back to (B_pad, N)
    if b_pad != B:
        out = out[:B]
    return out


if __name__ == "__main__":
    key = jax.random.PRNGKey(0)
    kx, kw, kx2, kx3 = jax.random.split(key, 4)

    # Small shapes consistent with the module: Linear(inputSize=32, outputSize=16), batch=8.
    B, inputSize, outputSize = 8, 32, 16
    x = jax.random.normal(kx, (B, inputSize), dtype=jnp.float32)
    weight = jax.random.normal(kw, (outputSize, inputSize), dtype=jnp.float32) * 0.1

    out = jax.block_until_ready(linear_coxph_regression(x, weight))
    ref = x @ weight.T
    assert out.shape == (B, outputSize)
    assert jnp.allclose(out, ref, atol=1e-5, rtol=1e-5), "mismatch vs reference (small)"

    # Larger batch: exercises the packed, multi-block pipelined path
    # (B=4096 -> 512 packed rows -> tile_rows=128, grid=(4,)).
    B2 = 4096
    x2 = jax.random.normal(kx2, (B2, inputSize), dtype=jnp.float32)
    out2 = jax.block_until_ready(linear_coxph_regression(x2, weight))
    ref2 = x2 @ weight.T
    assert out2.shape == (B2, outputSize)
    assert jnp.allclose(out2, ref2, atol=1e-5, rtol=1e-5), "mismatch vs reference (tiled)"

    # Ragged batch: exercises the zero-pad + slice path (B not a multiple of 8 or 128).
    B3 = 1000
    x3 = jax.random.normal(kx3, (B3, inputSize), dtype=jnp.float32)
    out3 = jax.block_until_ready(linear_coxph_regression(x3, weight))
    ref3 = x3 @ weight.T
    assert out3.shape == (B3, outputSize)
    assert jnp.allclose(out3, ref3, atol=1e-5, rtol=1e-5), "mismatch vs reference (ragged)"

    print("KERNEL_OK")
</pallas_src>

<mosaic_0001>
module attributes {stable_mosaic.version = 11 : i64} {
  func.func @_matmul_kernel(%arg0: i32, %arg1: memref<8x256xf32, #tpu.memory_space<vmem>>, %arg2: memref<256x128xf32, #tpu.memory_space<vmem>>, %arg3: memref<8x128xf32, #tpu.memory_space<vmem>>) attributes {dimension_semantics = [#tpu.dimension_semantics<parallel>], iteration_bounds = array<i64: 1>, scalar_prefetch = 0 : i64, scratch_operands = 0 : i64, tpu.core_type = #tpu.core_type<tc>, window_params = [{transform_indices = @transform_0, window_bounds = array<i64: 8, 256>}, {pipeline_mode = #tpu.pipeline_mode<synchronous>, transform_indices = @transform_1, window_bounds = array<i64: 256, 128>}, {transform_indices = @transform_2, window_bounds = array<i64: 8, 128>}]} {
    %c0 = arith.constant 0 : index
    %c0_0 = arith.constant 0 : index
    %0 = vector.load %arg1[%c0, %c0_0] : memref<8x256xf32, #tpu.memory_space<vmem>>, vector<8x256xf32>
    %c0_1 = arith.constant 0 : index
    %c0_2 = arith.constant 0 : index
    %1 = vector.load %arg2[%c0_1, %c0_2] : memref<256x128xf32, #tpu.memory_space<vmem>>, vector<256x128xf32>
    %cst = arith.constant dense<0.000000e+00> : vector<8x128xf32>
    %2 = tpu.matmul %0, %1, %cst {dimension_numbers = #tpu.dot_dimension_numbers<[1], [0], [0], [1], [0, 0, 1, 1], [], []>} : vector<8x256xf32>, vector<256x128xf32>, vector<8x128xf32> -> vector<8x128xf32>
    %c0_3 = arith.constant 0 : index
    %c0_4 = arith.constant 0 : index
    %3 = vector.load %arg3[%c0_3, %c0_4] : memref<8x128xf32, #tpu.memory_space<vmem>>, vector<8x128xf32>
    tpu.vector_store %arg3[%c0_3, %c0_4], %2 {strides = array<i32>} : memref<8x128xf32, #tpu.memory_space<vmem>>, vector<8x128xf32>,
    return
  }
  func.func @transform_0(%arg0: i32) -> (i32, i32) {
    %c0_i32 = arith.constant 0 : i32
    %c0_i32_0 = arith.constant 0 : i32
    return %arg0, %c0_i32 : i32, i32
  }
  func.func @transform_1(%arg0: i32) -> (i32, i32) {
    %c0_i32 = arith.constant 0 : i32
    %c0_i32_0 = arith.constant 0 : i32
    %c0_i32_1 = arith.constant 0 : i32
    return %c0_i32, %c0_i32_0 : i32, i32
  }
  func.func @transform_2(%arg0: i32) -> (i32, i32) {
    %c0_i32 = arith.constant 0 : i32
    %c0_i32_0 = arith.constant 0 : i32
    return %arg0, %c0_i32 : i32, i32
  }
}

</mosaic_0001>

<llo_original>
// kernel: tpu_custom_call.1
$region0: #{tpu_custom_call.1}
  #allocation0 [shape = 'u32[]', space=smem, size = 0x4, offset = 0x4, fixed_abs, tag = 'smem constant byte address 0x4 - core index']
  #allocation1 [shape = 'u32[72,128]{1,0:T(1,128)}', space=vmem, size = 0x9000, scoped, tag = 'internal scratch']
  %s0 = inlined_call_operand.hbm [shape: f32[8,256], index: 0, kind: input, shape index: {}]
  %s1 = inlined_call_operand.hbm [shape: f32[256,128], index: 1, kind: input, shape index: {}]
  %s2 = inlined_call_operand.hbm [shape: f32[8,128], index: 2, kind: output, shape index: {}]
  %s3 = sld [smem:[#allocation0]]
  $region26: #{tpu_custom_call.1} parent=0
    _
  %s5 = ssub.s32 1, %s3
  %s6 = scalar_select 0, %s5, %s3
  $region1: #{tpu_custom_call.1} parent=0
    #allocation2 [shape = 'u8[8192]{0}', space=vmem, size = 0x2000, scoped, tag = 'input window, operand 0, single buffered']
    #allocation3 [shape = 's32[1]{0}', space=sflag, size = 0x4, scoped, tag = 'scoped memory for tpu_custom_call.1']
    #allocation4 [shape = 's32[1]{0}', space=sflag, size = 0x4, scoped, tag = 'scoped memory for tpu_custom_call.1']
    #allocation5 [shape = 'u8[131072]{0}', space=vmem, size = 0x20000, scoped, tag = 'input window, operand 1, single buffered']
    #allocation6 [shape = 's32[1]{0}', space=sflag, size = 0x4, scoped, tag = 'scoped memory for tpu_custom_call.1']
    #allocation7 [shape = 'u8[4096]{0}', space=vmem, size = 0x1000, scoped, tag = 'output window, operand 0, single buffered']
    %7 = vsyncpa [#allocation3], 0
    %8 = vsyncpa [#allocation6], 0
    %9 = vsyncpa [#allocation4], 0
    // Predicated region
    $region2: #{tpu_custom_call.1} parent=1 // pred_check
      _
    $region3: #{tpu_custom_call.1} parent=1 // pred_check_branch
      %11 = sbr.rel (0) target = $region5
    $region4: #{tpu_custom_call.1} parent=1 // pred_region
      %13 = vsyncadd [#allocation3], 0
      %s15 = sshll.u32 %s0, 4
      %s16 = int_to_ptr.hbm [resolvable:$true] %s15
      %s17 = sshll.u32 [#allocation2], 4
      %s18 = int_to_ptr.vmem [resolvable:$true] %s17
      %20 = dma.hbm_to_vmem [thread:$0]  %s16, 256, %s18, [#allocation3]
    $region5: #{tpu_custom_call.1} parent=1 // pred_fallthru
      _
    // Predicated region
    $region6: #{tpu_custom_call.1} parent=1 // pred_check
      _
    $region7: #{tpu_custom_call.1} parent=1 // pred_check_branch
      %22 = sbr.rel (0) target = $region9
    $region8: #{tpu_custom_call.1} parent=1 // pred_region
      %24 = vsyncadd [#allocation6], 0
      %s25 = sshll.u32 %s1, 4
      %s26 = int_to_ptr.hbm [resolvable:$true] %s25
      %s27 = sshll.u32 [#allocation5], 4
      %s28 = int_to_ptr.vmem [resolvable:$true] %s27
      %33 = dma.hbm_to_vmem [thread:$0]  %s26, 4096, %s28, [#allocation6], 128, 128, 8
    $region9: #{tpu_custom_call.1} parent=1 // pred_fallthru
      _
    // Predicated region
    $region10: #{tpu_custom_call.1} parent=1 // pred_check
      _
    $region11: #{tpu_custom_call.1} parent=1 // pred_check_branch
      %35 = sbr.rel (0) target = $region13
    $region12: #{tpu_custom_call.1} parent=1 // pred_region
      %37 = dma.done [#allocation3], 256
    $region13: #{tpu_custom_call.1} parent=1 // pred_fallthru
      _
    // Predicated region
    $region14: #{tpu_custom_call.1} parent=1 // pred_check
      _
    $region15: #{tpu_custom_call.1} parent=1 // pred_check_branch
      %39 = sbr.rel (0) target = $region17
    $region16: #{tpu_custom_call.1} parent=1 // pred_region
      %41 = dma.done [#allocation6], 4096
    $region17: #{tpu_custom_call.1} parent=1 // pred_fallthru
      _
    %v42 = vld [vmem:[#allocation2] sm:$0xff]
    %v43 = vld [vmem:[#allocation2 + $0x8] sm:$0xff]
    %v44 = vld [vmem:[#allocation5] sm:$0xff]
    %v45 = vld [vmem:[#allocation5 + $0x8] sm:$0xff]
    %v46 = vld [vmem:[#allocation5 + $0x10] sm:$0xff]
    %v47 = vld [vmem:[#allocation5 + $0x18] sm:$0xff]
    %v48 = vld [vmem:[#allocation5 + $0x20] sm:$0xff]
    %v49 = vld [vmem:[#allocation5 + $0x28] sm:$0xff]
    %v50 = vld [vmem:[#allocation5 + $0x30] sm:$0xff]
    %v51 = vld [vmem:[#allocation5 + $0x38] sm:$0xff]
    %v52 = vld [vmem:[#allocation5 + $0x40] sm:$0xff]
    %v53 = vld [vmem:[#allocation5 + $0x48] sm:$0xff]
    %v54 = vld [vmem:[#allocation5 + $0x50] sm:$0xff]
    %v55 = vld [vmem:[#allocation5 + $0x58] sm:$0xff]
    %v56 = vld [vmem:[#allocation5 + $0x60] sm:$0xff]
    %v57 = vld [vmem:[#allocation5 + $0x68] sm:$0xff]
    %v58 = vld [vmem:[#allocation5 + $0x70] sm:$0xff]
    %v59 = vld [vmem:[#allocation5 + $0x78] sm:$0xff]
    %v60 = vld [vmem:[#allocation5 + $0x80] sm:$0xff]
    %v61 = vld [vmem:[#allocation5 + $0x88] sm:$0xff]
    %v62 = vld [vmem:[#allocation5 + $0x90] sm:$0xff]
    %v63 = vld [vmem:[#allocation5 + $0x98] sm:$0xff]
    %v64 = vld [vmem:[#allocation5 + $0xa0] sm:$0xff]
    %v65 = vld [vmem:[#allocation5 + $0xa8] sm:$0xff]
    %v66 = vld [vmem:[#allocation5 + $0xb0] sm:$0xff]
    %v67 = vld [vmem:[#allocation5 + $0xb8] sm:$0xff]
    %v68 = vld [vmem:[#allocation5 + $0xc0] sm:$0xff]
    %v69 = vld [vmem:[#allocation5 + $0xc8] sm:$0xff]
    %v70 = vld [vmem:[#allocation5 + $0xd0] sm:$0xff]
    %v71 = vld [vmem:[#allocation5 + $0xd8] sm:$0xff]
    %v72 = vld [vmem:[#allocation5 + $0xe0] sm:$0xff]
    %v73 = vld [vmem:[#allocation5 + $0xe8] sm:$0xff]
    %v74 = vld [vmem:[#allocation5 + $0xf0] sm:$0xff]
    %v75 = vld [vmem:[#allocation5 + $0xf8] sm:$0xff]
    %76 = vmatpush.msra.mxu0 %v59
    %77 = vmatpush.msra.mxu0 %v58
    %78 = vmatpush.msra.mxu0 %v57
    %79 = vmatpush.msra.mxu0 %v56
    %80 = vmatpush.msra.mxu0 %v55
    %81 = vmatpush.msra.mxu0 %v54
    %82 = vmatpush.msra.mxu0 %v53
    %83 = vmatpush.msra.mxu0 %v52
    %84 = vmatpush.msra.mxu0 %v51
    %85 = vmatpush.msra.mxu0 %v50
    %86 = vmatpush.msra.mxu0 %v49
    %87 = vmatpush.msra.mxu0 %v48
    %88 = vmatpush.msra.mxu0 %v47
    %89 = vmatpush.msra.mxu0 %v46
    %90 = vmatpush.msra.mxu0 %v45
    %91 = vmatpush.msra.mxu0 %v44
    %92 = vmatmul.f32.gmra.mxu0 %v42
    %v93 = vpop.f32.mrf.mxu0
    %v94 = vadd.f32 0.0, %v93
    %95 = vdwg.mxu0
    %96 = vmatpush.msra.mxu0 %v75
    %97 = vmatpush.msra.mxu0 %v74
    %98 = vmatpush.msra.mxu0 %v73
    %99 = vmatpush.msra.mxu0 %v72
    %100 = vmatpush.msra.mxu0 %v71
    %101 = vmatpush.msra.mxu0 %v70
    %102 = vmatpush.msra.mxu0 %v69
    %103 = vmatpush.msra.mxu0 %v68
    %104 = vmatpush.msra.mxu0 %v67
    %105 = vmatpush.msra.mxu0 %v66
    %106 = vmatpush.msra.mxu0 %v65
    %107 = vmatpush.msra.mxu0 %v64
    %108 = vmatpush.msra.mxu0 %v63
    %109 = vmatpush.msra.mxu0 %v62
    %110 = vmatpush.msra.mxu0 %v61
    %111 = vmatpush.msra.mxu0 %v60
    %112 = vmatmul.f32.gmra.mxu0 %v43
    %v113 = vpop.f32.mrf.mxu0
    %v114 = vadd.f32 %v94, %v113
    %115 = vdwg.mxu0
    %116 = vst [vmem:[#allocation7] sm:$0xff] %v114
    // Predicated region
    $region18: #{tpu_custom_call.1} parent=1 // pred_check
      _
    $region19: #{tpu_custom_call.1} parent=1 // pred_check_branch
      %118 = sbr.rel (0) target = $region21
    $region20: #{tpu_custom_call.1} parent=1 // pred_region
      %120 = vsyncadd [#allocation4], 0
      %s122 = sshll.u32 [#allocation7], 4
      %s123 = int_to_ptr.vmem [resolvable:$true] %s122
      %s124 = sshll.u32 %s2, 4
      %s125 = int_to_ptr.hbm [resolvable:$true] %s124
      %127 = dma.vmem_to_hbm [thread:$0]  %s123, 128, %s125, [#allocation4]
    $region21: #{tpu_custom_call.1} parent=1 // pred_fallthru
      _
    // Predicated region
    $region22: #{tpu_custom_call.1} parent=1 // pred_check
      _
    $region23: #{tpu_custom_call.1} parent=1 // pred_check_branch
      %129 = sbr.rel (0) target = $region25
    $region24: #{tpu_custom_call.1} parent=1 // pred_region
      %131 = dma.done [#allocation4], 128
    $region25: #{tpu_custom_call.1} parent=1 // pred_fallthru
      _
    %132 = vsyncpa [#allocation3], 1
    %133 = vsyncpa [#allocation6], 1
    %134 = vsyncpa [#allocation4], 1

</llo_original>
